<compile_context>
chip_gen: v5e
topology: v5e:2x2
jax: 0.10.0
libtpu: 0.0.40
codegen_flags: <defaults>
</compile_context>

<pallas_src>
import math

import jax
import jax.numpy as jnp
from jax.experimental import pallas as pl
from jax.experimental.pallas import tpu as pltpu


def _round_up(v, m):
    return ((v + m - 1) // m) * m


def _vmem_budget_bytes():
    """~80% of this generation's physical VMEM (headroom for compiler scratch / semaphores)."""
    try:
        cap = int(getattr(pltpu.get_tpu_info(), "vmem_capacity_bytes", 64 * 2**20))
    except Exception:
        cap = 64 * 2**20
    return int(0.8 * cap)


def _lpe_kernel(x_ref, w_ref, pos_ref, o_ref):
    # x_ref:   (TM, E)   flattened (batch*seq) rows of the input
    # w_ref:   (E, TN)   weight tile in (E, H) layout (MXU-native RHS, no per-tile transpose)
    # pos_ref: (TM, TN)  pos_embed + bias tile (f32 or bf16)
    # o_ref:   (TM, TN)
    y = jnp.dot(x_ref[...], w_ref[...], preferred_element_type=jnp.float32)   # MXU, f32 acc
    o_ref[...] = (y + pos_ref[...].astype(jnp.float32)).astype(o_ref.dtype)   # f32 epilogue add


def learnable_positional_encoding(x, weight, bias, pos_embed, *, compute_dtype=None):
    """x: (B, S, E); weight: (H, E) PyTorch nn.Linear layout; bias: (H,); pos_embed: (S, H)."""
    B, S, E = x.shape
    H = weight.shape[0]
    M = B * S
    out_dtype = x.dtype
    if compute_dtype is None:
        compute_dtype = x.dtype
    compute_dtype = jnp.dtype(compute_dtype)

    in_sz = compute_dtype.itemsize
    out_sz = jnp.dtype(out_dtype).itemsize
    pos_dtype = jnp.bfloat16 if compute_dtype == jnp.dtype(jnp.bfloat16) else jnp.float32
    pos_sz = jnp.dtype(pos_dtype).itemsize

    # ------------------------- tile selection -------------------------
    budget = _vmem_budget_bytes()
    sub = 16 if in_sz < 4 else 8          # sublane packing multiple (bf16 packs 16 rows/vreg)
    MAX_T = 512

    # TM must keep every M-tile aligned with a whole number of pos_embed rows.
    g = (S * sub) // math.gcd(S, sub)     # lcm(S, sub)
    if g <= MAX_T:
        pos_mode = "rep"                  # TM is a multiple of S -> tiny repeated pos block
        TM = g * max(1, min(MAX_T // g, pl.cdiv(M, g)))
    else:
        d = 0
        for cand in range(MAX_T - (MAX_T % sub), 0, -sub):
            if S % cand == 0:
                d = cand
                break
        if d:
            pos_mode = "div"              # TM divides S -> pos block index = i % (S // TM)
            g = d
            TM = d
        else:
            pos_mode = "full"             # awkward S: per-flattened-row pos table
            g = sub
            TM = min(MAX_T, _round_up(min(M, MAX_T), sub))

    TN = min(MAX_T, _round_up(H, 128))

    def footprint(tm, tn):  # double-buffered per-step VMEM bytes
        return 2 * (tm * E * in_sz + E * tn * in_sz + tm * tn * pos_sz + tm * tn * out_sz)

    while footprint(TM, TN) > budget and TN > 128:
        TN -= 128
    while footprint(TM, TN) > budget and TM > g:
        TM = max(g, ((TM // 2) // g) * g)

    # Full-dimension blocks where possible (no block overrunning the whole array).
    if TM >= M:
        TM = M
    if TN >= H:
        TN = H            # whole H in one tile -> weight fully VMEM resident

    num_i = pl.cdiv(M, TM)
    num_j = pl.cdiv(H, TN)

    # ---------------- operand prep (cheap, amortized; no x pad, no output slice) ----------------
    xc = x.reshape(M, E).astype(compute_dtype)                     # reshape is layout-free
    wt = weight.astype(compute_dtype).T                            # (E, H): one small transpose
    pos_bias = pos_embed.astype(jnp.float32) + bias.astype(jnp.float32)[None, :]
    if pos_mode == "rep":
        pos_arr = jnp.tile(pos_bias, (TM // S, 1))                 # (TM, H), tiny
    elif pos_mode == "div":
        pos_arr = pos_bias                                         # (S, H)
    else:
        # TODO(synk): avoid this extra (M, H) HBM pass for large seq_len with no nice divisor.
        pos_arr = jnp.broadcast_to(pos_bias[None], (B, S, H)).reshape(M, H)
    pos_arr = pos_arr.astype(pos_dtype)
    R = pl.cdiv(pos_arr.shape[0], TM)   # number of distinct pos blocks along the M axis

    vmem_limit = int(min(budget, max(32 * 2**20, 2 * footprint(TM, TN))))

    out2 = pl.pallas_call(
        _lpe_kernel,
        out_shape=jax.ShapeDtypeStruct((M, H), out_dtype),
        grid_spec=pltpu.PrefetchScalarGridSpec(
            num_scalar_prefetch=0,
            grid=(num_j, num_i),                                    # H tiles outermost:
            in_specs=[                                              #   weight streamed once/call
                pl.BlockSpec((TM, E), lambda j, i: (i, 0)),         # x rows
                pl.BlockSpec((E, TN), lambda j, i: (0, j)),         # weight (E, H) tile
                pl.BlockSpec((TM, TN), lambda j, i: (i % R, j)),    # pos_embed + bias tile
            ],
            out_specs=pl.BlockSpec((TM, TN), lambda j, i: (i, j)),
        ),
        compiler_params=pltpu.CompilerParams(
            dimension_semantics=("parallel", "parallel"),
            vmem_limit_bytes=vmem_limit,
        ),
    )(xc, wt, pos_arr)

    return out2.reshape(B, S, H)


if __name__ == "__main__":
    # Small shapes consistent with the module: seq_len=8, embed_dim=16, hidden_size=32, batch=2.
    B, S, E, H = 2, 8, 16, 32

    key = jax.random.PRNGKey(0)
    kx, kw, kb, kp = jax.random.split(key, 4)

    x = jax.random.normal(kx, (B, S, E), dtype=jnp.float32)

    # Deterministic synthetic parameters (PyTorch inits pos_embed to zeros and Linear to
    # uniform — random values exercise the full fused compute path).
    weight = jax.random.normal(kw, (H, E), dtype=jnp.float32) * 0.1     # nn.Linear weight (H, E)
    bias = jax.random.normal(kb, (H,), dtype=jnp.float32) * 0.1         # nn.Linear bias (H,)
    pos_embed = jax.random.normal(kp, (S, H), dtype=jnp.float32) * 0.1  # nn.Parameter (S, H)

    ref = jnp.einsum("bse,he->bsh", x, weight) + bias[None, None, :] + pos_embed[None, :, :]

    # f32 path (exact, tight tolerance).
    out = jax.block_until_ready(learnable_positional_encoding(x, weight, bias, pos_embed))
    assert out.shape == (B, S, H)
    assert jnp.allclose(out, ref, atol=1e-5, rtol=1e-5)

    # bf16-input fast path (MXU bf16, f32 accumulation + f32 epilogue add).
    out_bf16 = jax.block_until_ready(
        learnable_positional_encoding(x, weight, bias, pos_embed, compute_dtype=jnp.bfloat16)
    )
    assert out_bf16.shape == (B, S, H)
    assert jnp.allclose(out_bf16.astype(jnp.float32), ref, atol=5e-2, rtol=5e-2)

    print("KERNEL_OK")
</pallas_src>

<mosaic_0001>
module attributes {stable_mosaic.version = 11 : i64} {
  func.func @_lpe_kernel(%arg0: i32, %arg1: i32, %arg2: memref<16x16xf32, #tpu.memory_space<vmem>>, %arg3: memref<16x32xf32, #tpu.memory_space<vmem>>, %arg4: memref<16x32xf32, #tpu.memory_space<vmem>>, %arg5: memref<16x32xf32, #tpu.memory_space<vmem>>) attributes {dimension_semantics = [#tpu.dimension_semantics<parallel>, #tpu.dimension_semantics<parallel>], iteration_bounds = array<i64: 1, 1>, scalar_prefetch = 0 : i64, scratch_operands = 0 : i64, tpu.core_type = #tpu.core_type<tc>, window_params = [{transform_indices = @transform_0, window_bounds = array<i64: 16, 16>}, {transform_indices = @transform_1, window_bounds = array<i64: 16, 32>}, {transform_indices = @transform_2, window_bounds = array<i64: 16, 32>}, {transform_indices = @transform_3, window_bounds = array<i64: 16, 32>}]} {
    %c0 = arith.constant 0 : index
    %c0_0 = arith.constant 0 : index
    %0 = vector.load %arg2[%c0, %c0_0] : memref<16x16xf32, #tpu.memory_space<vmem>>, vector<16x16xf32>
    %c0_1 = arith.constant 0 : index
    %c0_2 = arith.constant 0 : index
    %1 = vector.load %arg3[%c0_1, %c0_2] : memref<16x32xf32, #tpu.memory_space<vmem>>, vector<16x32xf32>
    %cst = arith.constant dense<0.000000e+00> : vector<16x32xf32>
    %2 = tpu.matmul %0, %1, %cst {dimension_numbers = #tpu.dot_dimension_numbers<[1], [0], [0], [1], [0, 0, 1, 1], [], []>} : vector<16x16xf32>, vector<16x32xf32>, vector<16x32xf32> -> vector<16x32xf32>
    %c0_3 = arith.constant 0 : index
    %c0_4 = arith.constant 0 : index
    %3 = vector.load %arg4[%c0_3, %c0_4] : memref<16x32xf32, #tpu.memory_space<vmem>>, vector<16x32xf32>
    %4 = arith.addf %2, %3 : vector<16x32xf32>
    %c0_5 = arith.constant 0 : index
    %c0_6 = arith.constant 0 : index
    %5 = vector.load %arg5[%c0_5, %c0_6] : memref<16x32xf32, #tpu.memory_space<vmem>>, vector<16x32xf32>
    tpu.vector_store %arg5[%c0_5, %c0_6], %4 {strides = array<i32>} : memref<16x32xf32, #tpu.memory_space<vmem>>, vector<16x32xf32>,
    return
  }
  func.func @transform_0(%arg0: i32, %arg1: i32) -> (i32, i32) {
    %c0_i32 = arith.constant 0 : i32
    %c0_i32_0 = arith.constant 0 : i32
    return %arg1, %c0_i32 : i32, i32
  }
  func.func @transform_1(%arg0: i32, %arg1: i32) -> (i32, i32) {
    %c0_i32 = arith.constant 0 : i32
    %c0_i32_0 = arith.constant 0 : i32
    return %c0_i32, %arg0 : i32, i32
  }
  func.func @transform_2(%arg0: i32, %arg1: i32) -> (i32, i32) {
    %c1_i32 = arith.constant 1 : i32
    %c0_i32 = arith.constant 0 : i32
    %0 = arith.cmpi eq, %c1_i32, %c0_i32 : i32
    %c1_i32_0 = arith.constant 1 : i32
    %1 = arith.select %0, %c1_i32_0, %c1_i32 : i32
    %2 = arith.remsi %arg1, %1 : i32
    %c0_i32_1 = arith.constant 0 : i32
    %3 = arith.cmpi ne, %2, %c0_i32_1 : i32
    %c0_i32_2 = arith.constant 0 : i32
    %4 = arith.cmpi slt, %2, %c0_i32_2 : i32
    %c0_i32_3 = arith.constant 0 : i32
    %5 = arith.cmpi slt, %1, %c0_i32_3 : i32
    %6 = arith.xori %4, %5 : i1
    %7 = arith.andi %6, %3 : i1
    %8 = arith.addi %2, %1 : i32
    %9 = arith.select %7, %8, %2 : i32
    %c0_i32_4 = arith.constant 0 : i32
    return %9, %arg0 : i32, i32
  }
  func.func @transform_3(%arg0: i32, %arg1: i32) -> (i32, i32) {
    %c0_i32 = arith.constant 0 : i32
    return %arg1, %arg0 : i32, i32
  }
}

</mosaic_0001>

<llo_original>
// kernel: tpu_custom_call.1
$region0: #{tpu_custom_call.1}
  #allocation0 [shape = 'u32[]', space=smem, size = 0x4, offset = 0x4, fixed_abs, tag = 'smem constant byte address 0x4 - core index']
  #allocation1 [shape = 'u32[72,128]{1,0:T(1,128)}', space=vmem, size = 0x9000, scoped, tag = 'internal scratch']
  %s0 = inlined_call_operand.hbm [shape: f32[16,16], index: 0, kind: input, shape index: {}]
  %s1 = inlined_call_operand.hbm [shape: f32[16,32], index: 1, kind: input, shape index: {}]
  %s2 = inlined_call_operand.hbm [shape: f32[16,32], index: 2, kind: input, shape index: {}]
  %s3 = inlined_call_operand.hbm [shape: f32[16,32], index: 3, kind: output, shape index: {}]
  %s4 = sld [smem:[#allocation0]]
  $region34: #{tpu_custom_call.1} parent=0
    _
  %s6 = ssub.s32 1, %s4
  %s7 = scalar_select 0, %s6, %s4
  $region1: #{tpu_custom_call.1} parent=0
    #allocation2 [shape = 'u8[8192]{0}', space=vmem, size = 0x2000, scoped, tag = 'input window, operand 0, single buffered']
    #allocation3 [shape = 's32[1]{0}', space=sflag, size = 0x4, scoped, tag = 'scoped memory for tpu_custom_call.1']
    #allocation4 [shape = 's32[1]{0}', space=sflag, size = 0x4, scoped, tag = 'scoped memory for tpu_custom_call.1']
    #allocation5 [shape = 'u8[8192]{0}', space=vmem, size = 0x2000, scoped, tag = 'input window, operand 1, single buffered']
    #allocation6 [shape = 's32[1]{0}', space=sflag, size = 0x4, scoped, tag = 'scoped memory for tpu_custom_call.1']
    #allocation7 [shape = 'u8[8192]{0}', space=vmem, size = 0x2000, scoped, tag = 'input window, operand 2, single buffered']
    #allocation8 [shape = 'u8[8192]{0}', space=vmem, size = 0x2000, scoped, tag = 'output window, operand 0, single buffered']
    %8 = vsyncpa [#allocation3], 0
    %9 = vsyncpa [#allocation6], 0
    %10 = vsyncpa [#allocation4], 0
    // Predicated region
    $region2: #{tpu_custom_call.1} parent=1 // pred_check
      _
    $region3: #{tpu_custom_call.1} parent=1 // pred_check_branch
      %12 = sbr.rel (0) target = $region5
    $region4: #{tpu_custom_call.1} parent=1 // pred_region
      %14 = vsyncadd [#allocation3], 0
      %s15 = sshll.u32 %s0, 4
      %s16 = int_to_ptr.hbm [resolvable:$true] %s15
      %s17 = sshll.u32 [#allocation2], 4
      %s18 = int_to_ptr.vmem [resolvable:$true] %s17
      %23 = dma.hbm_to_vmem [thread:$0]  %s16, 256, %s18, [#allocation3], 128, 128, 8
    $region5: #{tpu_custom_call.1} parent=1 // pred_fallthru
      _
    // Predicated region
    $region6: #{tpu_custom_call.1} parent=1 // pred_check
      _
    $region7: #{tpu_custom_call.1} parent=1 // pred_check_branch
      %25 = sbr.rel (0) target = $region9
    $region8: #{tpu_custom_call.1} parent=1 // pred_region
      %27 = vsyncadd [#allocation6], 0
      %s28 = sshll.u32 %s1, 4
      %s29 = int_to_ptr.hbm [resolvable:$true] %s28
      %s30 = sshll.u32 [#allocation5], 4
      %s31 = int_to_ptr.vmem [resolvable:$true] %s30
      %36 = dma.hbm_to_vmem [thread:$0]  %s29, 256, %s31, [#allocation6], 128, 128, 8
    $region9: #{tpu_custom_call.1} parent=1 // pred_fallthru
      _
    // Predicated region
    $region10: #{tpu_custom_call.1} parent=1 // pred_check
      _
    $region11: #{tpu_custom_call.1} parent=1 // pred_check_branch
      %38 = sbr.rel (0) target = $region13
    $region12: #{tpu_custom_call.1} parent=1 // pred_region
      %40 = vsyncadd [#allocation6], 0
      %s41 = sshll.u32 %s2, 4
      %s42 = int_to_ptr.hbm [resolvable:$true] %s41
      %s43 = sshll.u32 [#allocation7], 4
      %s44 = int_to_ptr.vmem [resolvable:$true] %s43
      %49 = dma.hbm_to_vmem [thread:$0]  %s42, 256, %s44, [#allocation6], 128, 128, 8
    $region13: #{tpu_custom_call.1} parent=1 // pred_fallthru
      _
    // Predicated region
    $region14: #{tpu_custom_call.1} parent=1 // pred_check
      _
    $region15: #{tpu_custom_call.1} parent=1 // pred_check_branch
      %51 = sbr.rel (0) target = $region17
    $region16: #{tpu_custom_call.1} parent=1 // pred_region
      %53 = dma.done [#allocation3], 256
    $region17: #{tpu_custom_call.1} parent=1 // pred_fallthru
      _
    // Predicated region
    $region18: #{tpu_custom_call.1} parent=1 // pred_check
      _
    $region19: #{tpu_custom_call.1} parent=1 // pred_check_branch
      %55 = sbr.rel (0) target = $region21
    $region20: #{tpu_custom_call.1} parent=1 // pred_region
      %57 = dma.done [#allocation6], 256
    $region21: #{tpu_custom_call.1} parent=1 // pred_fallthru
      _
    // Predicated region
    $region22: #{tpu_custom_call.1} parent=1 // pred_check
      _
    $region23: #{tpu_custom_call.1} parent=1 // pred_check_branch
      %59 = sbr.rel (0) target = $region25
    $region24: #{tpu_custom_call.1} parent=1 // pred_region
      %61 = dma.done [#allocation6], 256
    $region25: #{tpu_custom_call.1} parent=1 // pred_fallthru
      _
    %v62 = vld [vmem:[#allocation2] sm:$0xff]
    %v63 = vld [vmem:[#allocation2 + $0x8] sm:$0xff]
    %v64 = vld [vmem:[#allocation5] sm:$0xff]
    %v65 = vld [vmem:[#allocation5 + $0x8] sm:$0xff]
    %v66 = vld [vmem:[#allocation7] sm:$0xff]
    %v67 = vld [vmem:[#allocation7 + $0x8] sm:$0xff]
    %vm68 = vcmask 130048
    %v70 = vsel %vm68, %v62, 0
    %v73 = vsel %vm68, %v63, 0
    %75 = vmatpush.msra.mxu0 0.0
    %76 = vmatpush.msra.mxu0 0.0
    %77 = vmatpush.msra.mxu0 0.0
    %78 = vmatpush.msra.mxu0 0.0
    %79 = vmatpush.msra.mxu0 0.0
    %80 = vmatpush.msra.mxu0 0.0
    %81 = vmatpush.msra.mxu0 0.0
    %82 = vmatpush.msra.mxu0 0.0
    %83 = vmatpush.msra.mxu0 0.0
    %84 = vmatpush.msra.mxu0 0.0
    %85 = vmatpush.msra.mxu0 0.0
    %86 = vmatpush.msra.mxu0 0.0
    %87 = vmatpush.msra.mxu0 0.0
    %88 = vmatpush.msra.mxu0 0.0
    %89 = vmatpush.msra.mxu0 %v65
    %90 = vmatpush.msra.mxu0 %v64
    %91 = vmatmul.f32.gmra.mxu0 %v70
    %v92 = vpop.f32.mrf.mxu0
    %v93 = vadd.f32 %v66, %v92
    %94 = vmatmul.f32.gmra.mxu0 %v73
    %v95 = vpop.f32.mrf.mxu0
    %v96 = vadd.f32 %v67, %v95
    %97 = vdwg.mxu0
    %vm98 = vcmask 261120
    %99 = vst.msk [vmem:[#allocation8] sm:$0xff] %vm98, %v93
    %100 = vst.msk [vmem:[#allocation8 + $0x8] sm:$0xff] %vm98, %v96
    // Predicated region
    $region26: #{tpu_custom_call.1} parent=1 // pred_check
      _
    $region27: #{tpu_custom_call.1} parent=1 // pred_check_branch
      %102 = sbr.rel (0) target = $region29
    $region28: #{tpu_custom_call.1} parent=1 // pred_region
      %104 = vsyncadd [#allocation4], 0
      %s105 = sshll.u32 [#allocation8], 4
      %s106 = int_to_ptr.vmem [resolvable:$true] %s105
      %s107 = sshll.u32 %s3, 4
      %s108 = int_to_ptr.hbm [resolvable:$true] %s107
      %113 = dma.vmem_to_hbm [thread:$0]  %s106, 256, %s108, [#allocation4], 128, 128, 8
    $region29: #{tpu_custom_call.1} parent=1 // pred_fallthru
      _
    // Predicated region
    $region30: #{tpu_custom_call.1} parent=1 // pred_check
      _
    $region31: #{tpu_custom_call.1} parent=1 // pred_check_branch
      %115 = sbr.rel (0) target = $region33
    $region32: #{tpu_custom_call.1} parent=1 // pred_region
      %117 = dma.done [#allocation4], 256
    $region33: #{tpu_custom_call.1} parent=1 // pred_fallthru
      _
    %118 = vsyncpa [#allocation3], 1
    %119 = vsyncpa [#allocation6], 1
    %120 = vsyncpa [#allocation4], 1

</llo_original>
